<compile_context>
chip_gen: v6e
topology: v6e:2x2x1
jax: 0.10.0
libtpu: 0.0.40
codegen_flags: <defaults>
</compile_context>

<pallas_src>
import functools

import jax
import jax.numpy as jnp
from jax.experimental import pallas as pl
from jax.experimental.pallas import tpu as pltpu


def _sigmoid(x):
    # sigmoid(x) == 0.5 * tanh(0.5 * x) + 0.5 ; tanh uses the (otherwise idle) EUP.
    return 0.5 * jnp.tanh(0.5 * x) + 0.5


def _dice_rows_kernel(pred_ref, tgt_ref, out_ref, acc_pt, acc_p, acc_t, *,
                      hw, lane_tile, nj, n_full_tiles, any_tail):
    """Unmasked path. pred/tgt blocks are (TR, TL) tiles of the (B*C, H*W) view.

    Accumulates per-row lane sums of (p*t_raw, p, t_raw) into (TR, 1) VMEM
    accumulators; writes the (TR, 3) partial sums once per (p_split, row_tile).
    Label smoothing is applied in the JAX epilogue.
    """
    p_id = pl.program_id(0)
    j = pl.program_id(2)

    @pl.when(j == 0)
    def _():
        acc_pt[...] = jnp.zeros_like(acc_pt)
        acc_p[...] = jnp.zeros_like(acc_p)
        acc_t[...] = jnp.zeros_like(acc_t)

    x = pred_ref[...].astype(jnp.float32)      # (TR, TL) raw logits
    t = tgt_ref[...].astype(jnp.float32)       # (TR, TL) raw targets

    def accumulate(p_v, t_v):
        acc_pt[...] += jnp.sum(p_v * t_v, axis=-1, keepdims=True)
        acc_p[...] += jnp.sum(p_v, axis=-1, keepdims=True)
        acc_t[...] += jnp.sum(t_v, axis=-1, keepdims=True)

    if any_tail:
        tile = p_id * nj + j                   # global lane-tile index

        @pl.when(tile < n_full_tiles)          # fully in-bounds tiles: no masking
        def _():
            accumulate(_sigmoid(x), t)

        @pl.when(tile >= n_full_tiles)         # partial / fully-OOB (clamped) tiles
        def _():
            col = tile * lane_tile + jax.lax.broadcasted_iota(
                jnp.int32, (1, lane_tile), 1)
            valid = col < hw                   # (1, TL)
            p_v = jnp.where(valid, _sigmoid(x), 0.0)
            t_v = jnp.where(valid, t, 0.0)
            accumulate(p_v, t_v)
    else:
        accumulate(_sigmoid(x), t)

    @pl.when(j == nj - 1)
    def _():
        out_ref[0, 0] = jnp.concatenate(
            [acc_pt[...], acc_p[...], acc_t[...]], axis=-1)      # (TR, 3)


def _dice_masked_kernel(pred_ref, tgt_ref, out_ref, acc_pt, acc_p, acc_t, *,
                        hw, lane_tile, nj, n_full_tiles, any_tail,
                        ls_scale, ls_bias):
    """Masked path. pred/tgt blocks are (1, C, TL) tiles of the (B, C, H*W) view.

    Needs the per-position sum over channels (sublane reduce over C), so the
    channel axis stays on sublanes. Label smoothing is applied in-kernel here.
    """
    p_id = pl.program_id(0)
    j = pl.program_id(2)

    @pl.when(j == 0)
    def _():
        acc_pt[...] = jnp.zeros_like(acc_pt)
        acc_p[...] = jnp.zeros_like(acc_p)
        acc_t[...] = jnp.zeros_like(acc_t)

    x = pred_ref[0].astype(jnp.float32)        # (C, TL)
    t_raw = tgt_ref[0].astype(jnp.float32)     # (C, TL)

    def accumulate(p_v, t_v, m_v):
        pm = p_v * m_v
        acc_pt[...] += jnp.sum(pm * t_v, axis=-1, keepdims=True)
        acc_p[...] += jnp.sum(pm, axis=-1, keepdims=True)
        acc_t[...] += jnp.sum(t_v * m_v, axis=-1, keepdims=True)

    def body(valid):
        # Mask uses the ORIGINAL (pre-smoothing) targets: channel sum == 1.
        chan = (jnp.sum(t_raw, axis=0, keepdims=True) == 1.0)    # (1, TL) bool
        p_v = _sigmoid(x)
        t_v = t_raw * ls_scale + ls_bias
        if valid is None:
            m_v = chan.astype(jnp.float32)
        else:
            m_v = jnp.logical_and(chan, valid).astype(jnp.float32)
            p_v = jnp.where(valid, p_v, 0.0)   # sanitize possible OOB garbage
            t_v = jnp.where(valid, t_v, 0.0)
        accumulate(p_v, t_v, m_v)

    if any_tail:
        tile = p_id * nj + j

        @pl.when(tile < n_full_tiles)
        def _():
            body(None)

        @pl.when(tile >= n_full_tiles)
        def _():
            col = tile * lane_tile + jax.lax.broadcasted_iota(
                jnp.int32, (1, lane_tile), 1)
            body(col < hw)
    else:
        body(None)

    @pl.when(j == nj - 1)
    def _():
        out_ref[0, 0] = jnp.concatenate(
            [acc_pt[...], acc_p[...], acc_t[...]], axis=-1)      # (C, 3)


def _choose_lane_tile(hw, rows, max_block_bytes):
    """Largest lane tile (multiple of 128, or the full extent) within the budget."""
    budget = max(128, (max_block_bytes // 4) // max(rows, 1))
    if hw <= budget:
        return hw, 1                       # full-extent block is always legal
    tl = max(128, (budget // 128) * 128)
    return tl, pl.cdiv(hw, tl)


def dice_loss(pred, target, w, *, smooth=1.0, label_smoothing=0.0, masked=False,
              max_block_bytes=2 * 1024 * 1024):
    """pred, target: (B, C, H, W) arrays (NCHW, like the PyTorch module)."""
    B, C, H, W = pred.shape
    w = jnp.asarray(w, dtype=jnp.float32).reshape(-1)
    if w.shape[0] != C:
        raise ValueError("Loss weights should be equal to the output channels.")

    HW = H * W
    ls_scale = 1.0 - float(label_smoothing)
    ls_bias = float(label_smoothing) / float(C)
    compiler_params = pltpu.CompilerParams(
        dimension_semantics=("parallel", "parallel", "arbitrary"),
        vmem_limit_bytes=32 * 1024 * 1024)

    if not masked:
        # ---- unmasked: flatten to (B*C, H*W) for full sublane occupancy ----
        BC = B * C
        p2 = pred.reshape(BC, HW)
        t2 = target.reshape(BC, HW)
        if BC <= 512:
            tr, nr = BC, 1                 # full row extent (always legal)
        else:
            tr, nr = 512, pl.cdiv(BC, 512)
        tl, n_lane_tiles = _choose_lane_tile(HW, tr, max_block_bytes)
        # Split lane tiles across a parallel axis so both v7x TCs get work
        # even when there is only one row tile. Harmless on single-TC chips.
        np_split = 2 if (nr < 2 and n_lane_tiles >= 2) else 1
        nj = pl.cdiv(n_lane_tiles, np_split)
        n_full_tiles = HW // tl
        any_tail = (np_split * nj * tl) != HW
        last_tile = n_lane_tiles - 1

        kernel = functools.partial(
            _dice_rows_kernel, hw=int(HW), lane_tile=int(tl), nj=int(nj),
            n_full_tiles=int(n_full_tiles), any_tail=bool(any_tail))

        def in_map(p, r, j):
            return (r, jnp.minimum(p * nj + j, last_tile))

        sums = pl.pallas_call(
            kernel,
            out_shape=jax.ShapeDtypeStruct((np_split, nr, tr, 3), jnp.float32),
            grid_spec=pltpu.PrefetchScalarGridSpec(
                num_scalar_prefetch=0,
                grid=(np_split, nr, nj),
                in_specs=[pl.BlockSpec((tr, tl), in_map),
                          pl.BlockSpec((tr, tl), in_map)],
                out_specs=pl.BlockSpec((1, 1, tr, 3), lambda p, r, j: (p, r, 0, 0)),
                scratch_shapes=[pltpu.VMEM((tr, 1), jnp.float32)] * 3,
            ),
            compiler_params=compiler_params,
        )(p2, t2)

        per_row = jnp.sum(sums, axis=0).reshape(nr * tr, 3)[:BC]   # (B*C, 3)
        per_chan = jnp.sum(per_row.reshape(B, C, 3), axis=0)       # (C, 3)
        s_pt, s_p, s_t = per_chan[:, 0], per_chan[:, 1], per_chan[:, 2]
        inter = ls_scale * s_pt + ls_bias * s_p                    # label-smooth hoist
        a_sum = s_p
        b_sum = ls_scale * s_t + ls_bias * float(B * HW)
    else:
        # ---- masked: keep (B, C, H*W) layout (needs cross-channel sums) ----
        p3 = pred.reshape(B, C, HW)
        t3 = target.reshape(B, C, HW)
        tl, n_lane_tiles = _choose_lane_tile(HW, C, max_block_bytes)
        np_split = 2 if (B < 2 and n_lane_tiles >= 2) else 1
        nj = pl.cdiv(n_lane_tiles, np_split)
        n_full_tiles = HW // tl
        any_tail = (np_split * nj * tl) != HW
        last_tile = n_lane_tiles - 1

        kernel = functools.partial(
            _dice_masked_kernel, hw=int(HW), lane_tile=int(tl), nj=int(nj),
            n_full_tiles=int(n_full_tiles), any_tail=bool(any_tail),
            ls_scale=ls_scale, ls_bias=ls_bias)

        def in_map(p, b, j):
            return (b, 0, jnp.minimum(p * nj + j, last_tile))

        sums = pl.pallas_call(
            kernel,
            out_shape=jax.ShapeDtypeStruct((np_split, B, C, 3), jnp.float32),
            grid_spec=pltpu.PrefetchScalarGridSpec(
                num_scalar_prefetch=0,
                grid=(np_split, B, nj),
                in_specs=[pl.BlockSpec((1, C, tl), in_map),
                          pl.BlockSpec((1, C, tl), in_map)],
                out_specs=pl.BlockSpec((1, 1, C, 3), lambda p, b, j: (p, b, 0, 0)),
                scratch_shapes=[pltpu.VMEM((C, 1), jnp.float32)] * 3,
            ),
            compiler_params=compiler_params,
        )(p3, t3)

        per_chan = jnp.sum(sums, axis=(0, 1))                      # (C, 3)
        inter, a_sum, b_sum = per_chan[:, 0], per_chan[:, 1], per_chan[:, 2]

    dice = 1.0 - (2.0 * inter + smooth) / (a_sum + b_sum + smooth)
    return jnp.sum(dice * w)


def _dice_loss_ref(pred, target, w, *, smooth=1.0, label_smoothing=0.0, masked=False):
    """Pure-JAX reference mirroring the PyTorch forward."""
    B, C, H, W = pred.shape
    if masked:
        mask = (jnp.sum(target, axis=1) == 1)                      # (B, H, W)
    else:
        mask = jnp.ones((B, H, W), dtype=bool)
    target = target * (1.0 - label_smoothing) + label_smoothing / C
    p = jax.nn.sigmoid(pred).transpose(0, 2, 3, 1)                 # (B, H, W, C)
    t = target.transpose(0, 2, 3, 1)
    m = mask[..., None].astype(p.dtype)
    inter = jnp.sum(p * t * m, axis=(0, 1, 2))
    a = jnp.sum(p * m, axis=(0, 1, 2))
    b = jnp.sum(t * m, axis=(0, 1, 2))
    dice = 1.0 - (2.0 * inter + smooth) / (a + b + smooth)
    return jnp.sum(dice * jnp.asarray(w, dtype=p.dtype))


if __name__ == "__main__":
    # Module config (deterministic, in-script): outchannels=4, per-channel weights,
    # smooth=1.0, label_smoothing=0.1.
    B, C, H, W = 2, 4, 16, 16
    smooth = 1.0
    label_smoothing = 0.1
    w = jnp.array([1.0, 0.5, 2.0, 1.5], dtype=jnp.float32)

    key = jax.random.PRNGKey(0)
    k1, k2, k3, k4, k5, k6 = jax.random.split(key, 6)
    pred = jax.random.normal(k1, (B, C, H, W), dtype=jnp.float32)
    target = (jax.random.uniform(k2, (B, C, H, W)) > 0.5).astype(jnp.float32)

    # 1) unmasked, single full-extent lane tile.
    loss = dice_loss(pred, target, w, smooth=smooth,
                     label_smoothing=label_smoothing, masked=False)
    loss = jax.block_until_ready(loss)
    ref = _dice_loss_ref(pred, target, w, smooth=smooth,
                         label_smoothing=label_smoothing, masked=False)
    assert jnp.allclose(loss, ref, rtol=1e-5, atol=1e-5), (loss, ref)

    # 2) unmasked, forced 128-lane tiles + lane split (P=2) + ragged tail.
    H2, W2 = 20, 20                       # H*W = 400 -> 4 tiles (last partial)
    pred2 = jax.random.normal(k3, (B, C, H2, W2), dtype=jnp.float32)
    target2 = (jax.random.uniform(k4, (B, C, H2, W2)) > 0.5).astype(jnp.float32)
    loss2 = dice_loss(pred2, target2, w, smooth=smooth,
                      label_smoothing=label_smoothing, masked=False,
                      max_block_bytes=8 * 128 * 4)
    loss2 = jax.block_until_ready(loss2)
    ref2 = _dice_loss_ref(pred2, target2, w, smooth=smooth,
                          label_smoothing=label_smoothing, masked=False)
    assert jnp.allclose(loss2, ref2, rtol=1e-5, atol=1e-5), (loss2, ref2)

    # 3) masked path: one-hot targets with some positions dropped (channel sum 0).
    labels = jax.random.randint(k5, (B, H, W), 0, C)
    onehot = jax.nn.one_hot(labels, C, dtype=jnp.float32)          # (B, H, W, C)
    tgt_m = jnp.transpose(onehot, (0, 3, 1, 2))                    # (B, C, H, W)
    drop = (jax.random.uniform(k6, (B, 1, H, W)) > 0.7).astype(jnp.float32)
    tgt_m = tgt_m * (1.0 - drop)
    loss3 = dice_loss(pred, tgt_m, w, smooth=smooth,
                      label_smoothing=label_smoothing, masked=True)
    loss3 = jax.block_until_ready(loss3)
    ref3 = _dice_loss_ref(pred, tgt_m, w, smooth=smooth,
                          label_smoothing=label_smoothing, masked=True)
    assert jnp.allclose(loss3, ref3, rtol=1e-5, atol=1e-5), (loss3, ref3)

    # 4) masked path, forced multi-tile accumulation (B=2 -> P=1, nj=2).
    loss4 = dice_loss(pred, tgt_m, w, smooth=smooth,
                      label_smoothing=label_smoothing, masked=True,
                      max_block_bytes=4 * 128 * 4)
    loss4 = jax.block_until_ready(loss4)
    assert jnp.allclose(loss4, ref3, rtol=1e-5, atol=1e-5), (loss4, ref3)

    # 5) masked path, B=1 -> lane split P=2 + ragged tail.
    pred5 = pred2[:1]
    labels5 = jax.random.randint(k5, (1, H2, W2), 0, C)
    tgt5 = jnp.transpose(jax.nn.one_hot(labels5, C, dtype=jnp.float32), (0, 3, 1, 2))
    loss5 = dice_loss(pred5, tgt5, w, smooth=smooth,
                      label_smoothing=label_smoothing, masked=True,
                      max_block_bytes=4 * 128 * 4)
    loss5 = jax.block_until_ready(loss5)
    ref5 = _dice_loss_ref(pred5, tgt5, w, smooth=smooth,
                          label_smoothing=label_smoothing, masked=True)
    assert jnp.allclose(loss5, ref5, rtol=1e-5, atol=1e-5), (loss5, ref5)

    print("KERNEL_OK")
</pallas_src>

<mosaic_0001>
module attributes {stable_mosaic.version = 11 : i64} {
  func.func @_dice_rows_kernel(%arg0: i32, %arg1: i32, %arg2: i32, %arg3: memref<8x256xf32, #tpu.memory_space<vmem>>, %arg4: memref<8x256xf32, #tpu.memory_space<vmem>>, %arg5: memref<1x1x8x3xf32, #tpu.memory_space<vmem>>, %arg6: memref<8x1xf32, #tpu.memory_space<vmem>>, %arg7: memref<8x1xf32, #tpu.memory_space<vmem>>, %arg8: memref<8x1xf32, #tpu.memory_space<vmem>>) attributes {dimension_semantics = [#tpu.dimension_semantics<parallel>, #tpu.dimension_semantics<parallel>, #tpu.dimension_semantics<arbitrary>], iteration_bounds = array<i64: 1, 1, 1>, scalar_prefetch = 0 : i64, scratch_operands = 3 : i64, tpu.core_type = #tpu.core_type<tc>, window_params = [{transform_indices = @transform_0, window_bounds = array<i64: 8, 256>}, {transform_indices = @transform_1, window_bounds = array<i64: 8, 256>}, {transform_indices = @transform_2, window_bounds = array<i64: 1, 1, 8, 3>}]} {
    %c0_i32 = arith.constant 0 : i32
    %0 = arith.cmpi eq, %arg2, %c0_i32 : i32
    %1 = arith.extui %0 : i1 to i32
    %c0_i32_0 = arith.constant 0 : i32
    %2 = arith.cmpi ne, %1, %c0_i32_0 : i32
    scf.if %2 {
      %cst_23 = arith.constant 0.000000e+00 : f32
      %31 = vector.broadcast %cst_23 : f32 to vector<8x1xf32>
      %c0_24 = arith.constant 0 : index
      %c0_25 = arith.constant 0 : index
      %32 = vector.load %arg6[%c0_24, %c0_25] : memref<8x1xf32, #tpu.memory_space<vmem>>, vector<8x1xf32>
      tpu.vector_store %arg6[%c0_24, %c0_25], %31 {strides = array<i32>} : memref<8x1xf32, #tpu.memory_space<vmem>>, vector<8x1xf32>,
      %cst_26 = arith.constant 0.000000e+00 : f32
      %33 = vector.broadcast %cst_26 : f32 to vector<8x1xf32>
      %c0_27 = arith.constant 0 : index
      %c0_28 = arith.constant 0 : index
      %34 = vector.load %arg7[%c0_27, %c0_28] : memref<8x1xf32, #tpu.memory_space<vmem>>, vector<8x1xf32>
      tpu.vector_store %arg7[%c0_27, %c0_28], %33 {strides = array<i32>} : memref<8x1xf32, #tpu.memory_space<vmem>>, vector<8x1xf32>,
      %cst_29 = arith.constant 0.000000e+00 : f32
      %35 = vector.broadcast %cst_29 : f32 to vector<8x1xf32>
      %c0_30 = arith.constant 0 : index
      %c0_31 = arith.constant 0 : index
      %36 = vector.load %arg8[%c0_30, %c0_31] : memref<8x1xf32, #tpu.memory_space<vmem>>, vector<8x1xf32>
      tpu.vector_store %arg8[%c0_30, %c0_31], %35 {strides = array<i32>} : memref<8x1xf32, #tpu.memory_space<vmem>>, vector<8x1xf32>,
    } else {
    }
    %c0 = arith.constant 0 : index
    %c0_1 = arith.constant 0 : index
    %3 = vector.load %arg3[%c0, %c0_1] : memref<8x256xf32, #tpu.memory_space<vmem>>, vector<8x256xf32>
    %c0_2 = arith.constant 0 : index
    %c0_3 = arith.constant 0 : index
    %4 = vector.load %arg4[%c0_2, %c0_3] : memref<8x256xf32, #tpu.memory_space<vmem>>, vector<8x256xf32>
    %cst = arith.constant 5.000000e-01 : f32
    %5 = vector.broadcast %cst : f32 to vector<8x256xf32>
    %6 = arith.mulf %5, %3 : vector<8x256xf32>
    %7 = math.tanh %6 : vector<8x256xf32>
    %cst_4 = arith.constant 5.000000e-01 : f32
    %8 = vector.broadcast %cst_4 : f32 to vector<8x256xf32>
    %9 = arith.mulf %8, %7 : vector<8x256xf32>
    %cst_5 = arith.constant 5.000000e-01 : f32
    %10 = vector.broadcast %cst_5 : f32 to vector<8x256xf32>
    %11 = arith.addf %9, %10 : vector<8x256xf32>
    %c0_6 = arith.constant 0 : index
    %c0_7 = arith.constant 0 : index
    %12 = vector.load %arg6[%c0_6, %c0_7] : memref<8x1xf32, #tpu.memory_space<vmem>>, vector<8x1xf32>
    %13 = arith.mulf %11, %4 : vector<8x256xf32>
    %cst_8 = arith.constant dense<0.000000e+00> : vector<8xf32>
    %14 = vector.multi_reduction <add>, %13, %cst_8 [1] : vector<8x256xf32> to vector<8xf32>
    %15 = vector.shape_cast %14 : vector<8xf32> to vector<8x1xf32>
    %16 = arith.addf %12, %15 : vector<8x1xf32>
    %c0_9 = arith.constant 0 : index
    %c0_10 = arith.constant 0 : index
    %17 = vector.load %arg6[%c0_9, %c0_10] : memref<8x1xf32, #tpu.memory_space<vmem>>, vector<8x1xf32>
    tpu.vector_store %arg6[%c0_9, %c0_10], %16 {strides = array<i32>} : memref<8x1xf32, #tpu.memory_space<vmem>>, vector<8x1xf32>,
    %c0_11 = arith.constant 0 : index
    %c0_12 = arith.constant 0 : index
    %18 = vector.load %arg7[%c0_11, %c0_12] : memref<8x1xf32, #tpu.memory_space<vmem>>, vector<8x1xf32>
    %cst_13 = arith.constant dense<0.000000e+00> : vector<8xf32>
    %19 = vector.multi_reduction <add>, %11, %cst_13 [1] : vector<8x256xf32> to vector<8xf32>
    %20 = vector.shape_cast %19 : vector<8xf32> to vector<8x1xf32>
    %21 = arith.addf %18, %20 : vector<8x1xf32>
    %c0_14 = arith.constant 0 : index
    %c0_15 = arith.constant 0 : index
    %22 = vector.load %arg7[%c0_14, %c0_15] : memref<8x1xf32, #tpu.memory_space<vmem>>, vector<8x1xf32>
    tpu.vector_store %arg7[%c0_14, %c0_15], %21 {strides = array<i32>} : memref<8x1xf32, #tpu.memory_space<vmem>>, vector<8x1xf32>,
    %c0_16 = arith.constant 0 : index
    %c0_17 = arith.constant 0 : index
    %23 = vector.load %arg8[%c0_16, %c0_17] : memref<8x1xf32, #tpu.memory_space<vmem>>, vector<8x1xf32>
    %cst_18 = arith.constant dense<0.000000e+00> : vector<8xf32>
    %24 = vector.multi_reduction <add>, %4, %cst_18 [1] : vector<8x256xf32> to vector<8xf32>
    %25 = vector.shape_cast %24 : vector<8xf32> to vector<8x1xf32>
    %26 = arith.addf %23, %25 : vector<8x1xf32>
    %c0_19 = arith.constant 0 : index
    %c0_20 = arith.constant 0 : index
    %27 = vector.load %arg8[%c0_19, %c0_20] : memref<8x1xf32, #tpu.memory_space<vmem>>, vector<8x1xf32>
    tpu.vector_store %arg8[%c0_19, %c0_20], %26 {strides = array<i32>} : memref<8x1xf32, #tpu.memory_space<vmem>>, vector<8x1xf32>,
    %c0_i32_21 = arith.constant 0 : i32
    %28 = arith.cmpi eq, %arg2, %c0_i32_21 : i32
    %29 = arith.extui %28 : i1 to i32
    %c0_i32_22 = arith.constant 0 : i32
    %30 = arith.cmpi ne, %29, %c0_i32_22 : i32
    scf.if %30 {
      %c0_23 = arith.constant 0 : index
      %c0_24 = arith.constant 0 : index
      %31 = vector.load %arg6[%c0_23, %c0_24] : memref<8x1xf32, #tpu.memory_space<vmem>>, vector<8x1xf32>
      %c0_25 = arith.constant 0 : index
      %c0_26 = arith.constant 0 : index
      %32 = vector.load %arg7[%c0_25, %c0_26] : memref<8x1xf32, #tpu.memory_space<vmem>>, vector<8x1xf32>
      %c0_27 = arith.constant 0 : index
      %c0_28 = arith.constant 0 : index
      %33 = vector.load %arg8[%c0_27, %c0_28] : memref<8x1xf32, #tpu.memory_space<vmem>>, vector<8x1xf32>
      %34 = tpu.concatenate %31, %32, %33 in 1 : vector<8x1xf32>, vector<8x1xf32>, vector<8x1xf32> -> vector<8x3xf32>
      %c0_29 = arith.constant 0 : index
      %c0_30 = arith.constant 0 : index
      %c0_31 = arith.constant 0 : index
      %c0_32 = arith.constant 0 : index
      %35 = vector.load %arg5[%c0_29, %c0_30, %c0_31, %c0_32] : memref<1x1x8x3xf32, #tpu.memory_space<vmem>>, vector<1x1x8x3xf32>
      %36 = vector.shape_cast %35 : vector<1x1x8x3xf32> to vector<8x3xf32>
      %37 = vector.shape_cast %34 : vector<8x3xf32> to vector<1x1x8x3xf32>
      tpu.vector_store %arg5[%c0_29, %c0_30, %c0_31, %c0_32], %37 {strides = array<i32>} : memref<1x1x8x3xf32, #tpu.memory_space<vmem>>, vector<1x1x8x3xf32>,
    } else {
    }
    return
  }
  func.func @transform_0(%arg0: i32, %arg1: i32, %arg2: i32) -> (i32, i32) {
    %c1_i32 = arith.constant 1 : i32
    %0 = arith.muli %arg0, %c1_i32 : i32
    %1 = arith.addi %0, %arg2 : i32
    %c0_i32 = arith.constant 0 : i32
    %2 = arith.minsi %1, %c0_i32 : i32
    %c0_i32_0 = arith.constant 0 : i32
    return %arg1, %2 : i32, i32
  }
  func.func @transform_1(%arg0: i32, %arg1: i32, %arg2: i32) -> (i32, i32) {
    %c1_i32 = arith.constant 1 : i32
    %0 = arith.muli %arg0, %c1_i32 : i32
    %1 = arith.addi %0, %arg2 : i32
    %c0_i32 = arith.constant 0 : i32
    %2 = arith.minsi %1, %c0_i32 : i32
    %c0_i32_0 = arith.constant 0 : i32
    return %arg1, %2 : i32, i32
  }
  func.func @transform_2(%arg0: i32, %arg1: i32, %arg2: i32) -> (i32, i32, i32, i32) {
    %c0_i32 = arith.constant 0 : i32
    %c0_i32_0 = arith.constant 0 : i32
    %c0_i32_1 = arith.constant 0 : i32
    return %arg0, %arg1, %c0_i32, %c0_i32_0 : i32, i32, i32, i32
  }
}

</mosaic_0001>

<llo_original>
// kernel: tpu_custom_call.1
$region0: #{tpu_custom_call.1}
  #allocation0 [shape = 'u32[]', space=smem, size = 0x4, offset = 0x4, fixed_abs, tag = 'smem constant byte address 0x4 - core index']
  #allocation1 [shape = 'u32[144,128]{1,0:T(1,128)}', space=vmem, size = 0x12000, scoped, tag = 'internal scratch']
  #allocation2 [shape = 'f32[8,1]{1,0:T(8,128)}', space=vmem, size = 0x1000, scoped, tag = 'scratch operand']
  #allocation3 [shape = 'f32[8,1]{1,0:T(8,128)}', space=vmem, size = 0x1000, scoped, tag = 'scratch operand']
  #allocation4 [shape = 'f32[8,1]{1,0:T(8,128)}', space=vmem, size = 0x1000, scoped, tag = 'scratch operand']
  %s0 = inlined_call_operand.hbm [shape: f32[8,256], index: 0, kind: input, shape index: {}]
  %s1 = inlined_call_operand.hbm [shape: f32[8,256], index: 1, kind: input, shape index: {}]
  %s2 = inlined_call_operand.vmem [shape: f32[1,1,8,3], index: 2, kind: output, shape index: {}]
  %s3 = sld [smem:[#allocation0]]
  $region34: #{tpu_custom_call.1} parent=0
    _
  %s5 = ssub.s32 1, %s3
  %s6 = scalar_select 0, %s5, %s3
  $region1: #{tpu_custom_call.1} parent=0
    #allocation5 [shape = 'u8[8192]{0}', space=vmem, size = 0x2000, scoped, tag = 'input window, operand 0, single buffered']
    #allocation6 [shape = 's32[1]{0}', space=sflag, size = 0x4, scoped, tag = 'scoped memory for tpu_custom_call.1']
    #allocation7 [shape = 'u8[8192]{0}', space=vmem, size = 0x2000, scoped, tag = 'input window, operand 1, single buffered']
    #allocation8 [shape = 's32[1]{0}', space=sflag, size = 0x4, scoped, tag = 'scoped memory for tpu_custom_call.1']
    %7 = vsyncpa [#allocation6], 0
    %8 = vsyncpa [#allocation8], 0
    // Predicated region
    $region2: #{tpu_custom_call.1} parent=1 // pred_check
      _
    $region3: #{tpu_custom_call.1} parent=1 // pred_check_branch
      %10 = sbr.rel (0) target = $region5
    $region4: #{tpu_custom_call.1} parent=1 // pred_region
      %s11 = sadd.s32 0, 0
      %p12 = scmp.lt.s32.totalorder %s11, 0
      %s13 = scalar_select %p12, %s11, 0
      %s14 = smul.u32 2, %s13
      %s16 = ssub.s32 256, 256
      %17 = vsyncadd [#allocation6], %s16
      %s18 = smul.addr %s14, 128
      %s19 = scalar_lea.hbm %s0, %s18
      %s21 = sshll.u32 [#allocation5], 4
      %s22 = int_to_ptr.vmem [resolvable:$true] %s21
      %24 = dma.hbm_to_vmem [thread:$0]  %s19, 256, %s22, [#allocation6]
    $region5: #{tpu_custom_call.1} parent=1 // pred_fallthru
      _
    // Predicated region
    $region6: #{tpu_custom_call.1} parent=1 // pred_check
      _
    $region7: #{tpu_custom_call.1} parent=1 // pred_check_branch
      %26 = sbr.rel (0) target = $region9
    $region8: #{tpu_custom_call.1} parent=1 // pred_region
      %s27 = sadd.s32 0, 0
      %p28 = scmp.lt.s32.totalorder %s27, 0
      %s29 = scalar_select %p28, %s27, 0
      %s30 = smul.u32 2, %s29
      %s32 = ssub.s32 256, 256
      %33 = vsyncadd [#allocation8], %s32
      %s34 = smul.addr %s30, 128
      %s35 = scalar_lea.hbm %s1, %s34
      %s37 = sshll.u32 [#allocation7], 4
      %s38 = int_to_ptr.vmem [resolvable:$true] %s37
      %40 = dma.hbm_to_vmem [thread:$0]  %s35, 256, %s38, [#allocation8]
    $region9: #{tpu_custom_call.1} parent=1 // pred_fallthru
      _
    // Predicated region
    $region10: #{tpu_custom_call.1} parent=1 // pred_check
      _
    $region11: #{tpu_custom_call.1} parent=1 // pred_check_branch
      %42 = sbr.rel (0) target = $region13
    $region12: #{tpu_custom_call.1} parent=1 // pred_region
      %43 = dma.done [#allocation6], 256
    $region13: #{tpu_custom_call.1} parent=1 // pred_fallthru
      _
    // Predicated region
    $region14: #{tpu_custom_call.1} parent=1 // pred_check
      _
    $region15: #{tpu_custom_call.1} parent=1 // pred_check_branch
      %45 = sbr.rel (0) target = $region17
    $region16: #{tpu_custom_call.1} parent=1 // pred_region
      %46 = dma.done [#allocation8], 256
    $region17: #{tpu_custom_call.1} parent=1 // pred_fallthru
      _
    %s47 = sadd.s32 0, 0
    %p48 = scmp.lt.s32.totalorder %s47, 0
    %s49 = scalar_select %p48, %s47, 0
    %s50 = smul.u32 2, %s49
    %s51 = sadd.s32 0, 0
    %p52 = scmp.lt.s32.totalorder %s51, 0
    %s53 = scalar_select %p52, %s51, 0
    %s54 = smul.u32 2, %s53
    %p55 = scmp.eq.s32.totalorder 0, 0
    // Predicated region
    $region18: #{tpu_custom_call.1} parent=1 // pred_check
      %p56 = pneg %p55
    $region19: #{tpu_custom_call.1} parent=1 // pred_check_branch
      %58 = sbr.rel (%p56) target = $region21
    $region20: #{tpu_custom_call.1} parent=1 // pred_region
      %vm59 = vcmask 7168
      %60 = vst.msk [vmem:[#allocation2] sm:$0xff] %vm59, 0.0
      %61 = vst.msk [vmem:[#allocation3] sm:$0xff] %vm59, 0.0
      %62 = vst.msk [vmem:[#allocation4] sm:$0xff] %vm59, 0.0
    $region21: #{tpu_custom_call.1} parent=1 // pred_fallthru
      _
    %v63 = vld [vmem:[#allocation5] sm:$0xff]
    %v64 = vld [vmem:[#allocation5 + $0x8] sm:$0xff]
    %v65 = vld [vmem:[#allocation7] sm:$0xff]
    %v66 = vld [vmem:[#allocation7 + $0x8] sm:$0xff]
    %v67 = vmul.f32 %v63, 0.5
    %v68 = vmul.f32 %v64, 0.5
    %v69 = vtanh.pop %v67
    %v70 = vtanh.pop %v68
    %v71 = vmul.f32 %v69, 0.5
    %v72 = vmul.f32 %v70, 0.5
    %v73 = vadd.f32 %v71, 0.5
    %v74 = vadd.f32 %v72, 0.5
    %v75 = vld [vmem:[#allocation2] sm:$0xff]
    %v76 = vmul.f32 %v73, %v65
    %v77 = vmul.f32 %v74, %v66
    %v78 = vadd.f32 %v76, %v77
    %79 = vadd.xlane.f32.xlu0 %v78
    %v80 = vpop.xlane.xlu0 %79
    %v81 = vadd.f32 %v75, %v80
    %vm82 = vcmask 7168
    %83 = vst.msk [vmem:[#allocation2] sm:$0xff] %vm82, %v81
    %v84 = vld [vmem:[#allocation3] sm:$0xff]
    %v85 = vadd.f32 %v73, %v74
    %86 = vadd.xlane.f32.xlu0 %v85
    %v87 = vpop.xlane.xlu0 %86
    %v88 = vadd.f32 %v84, %v87
    %89 = vst.msk [vmem:[#allocation3] sm:$0xff] %vm82, %v88
    %v90 = vld [vmem:[#allocation4] sm:$0xff]
    %v91 = vadd.f32 %v65, %v66
    %92 = vadd.xlane.f32.xlu0 %v91
    %v93 = vpop.xlane.xlu0 %92
    %v94 = vadd.f32 %v90, %v93
    %95 = vst.msk [vmem:[#allocation4] sm:$0xff] %vm82, %v94
    // Predicated region
    $region22: #{tpu_custom_call.1} parent=1 // pred_check
      %p96 = pneg %p55
    $region23: #{tpu_custom_call.1} parent=1 // pred_check_branch
      %98 = sbr.rel (%p96) target = $region25
    $region24: #{tpu_custom_call.1} parent=1 // pred_region
      %v99 = vld [vmem:[#allocation2] sm:$0xff]
      %v100 = vld [vmem:[#allocation3] sm:$0xff]
      %v101 = vld [vmem:[#allocation4] sm:$0xff]
      %103 = vrot.lane.b32.xlu0 %v100, 1
      %v104 = vpop.permute.xlu0 %103
      %107 = vrot.lane.b32.xlu0 %v101, 2
      %v108 = vpop.permute.xlu0 %107
      %v110 = vsel %vm82, %v99, %v104
      %vm111 = vcmask 15360
      %v112 = vsel %vm111, %v110, %v108
      %vm113 = vcmask 23552
      %114 = vst.msk [vmem:[%s2] sm:$0xff] %vm113, %v112
    $region25: #{tpu_custom_call.1} parent=1 // pred_fallthru
      _
    // Predicated region
    $region26: #{tpu_custom_call.1} parent=1 // pred_check
      _
    $region27: #{tpu_custom_call.1} parent=1 // pred_check_branch
      %116 = sbr.rel (0) target = $region29
    $region28: #{tpu_custom_call.1} parent=1 // pred_region
      _
    $region29: #{tpu_custom_call.1} parent=1 // pred_fallthru
      _
    // Predicated region
    $region30: #{tpu_custom_call.1} parent=1 // pred_check
      _
    $region31: #{tpu_custom_call.1} parent=1 // pred_check_branch
      %118 = sbr.rel (0) target = $region33
    $region32: #{tpu_custom_call.1} parent=1 // pred_region
      _
    $region33: #{tpu_custom_call.1} parent=1 // pred_fallthru
      _
    %119 = vsyncpa [#allocation6], 1
    %120 = vsyncpa [#allocation8], 1

</llo_original>
